<compile_context>
chip_gen: v7x
topology: tpu7x:2x2x1
jax: 0.10.0
libtpu: 0.0.40
codegen_flags: <defaults>
</compile_context>

<pallas_src>
import jax
import jax.numpy as jnp
from jax import lax
from jax.experimental import pallas as pl
from jax.experimental.pallas import tpu as pltpu


def _pooler_kernel(x_ref, w_ref, b_ref, o_ref):
    # x_ref: [Bp, H_in]   first-token hidden states (slice done in wrapper)
    # w_ref: [TN, H_in]   nn.Linear weight row tile (original [out, in] layout)
    # b_ref: [1, TN]      bias tile
    # o_ref: [Bp, TN]     output tile
    x = x_ref[...]
    w = w_ref[...]
    if x.dtype != w.dtype:
        # Feed the MXU in the stored (typically bf16) weight dtype.
        x = x.astype(w.dtype)
    # Contract x's H_in with w's H_in (no transpose of the weight in HBM).
    y = lax.dot_general(
        x, w,
        dimension_numbers=(((1,), (1,)), ((), ())),
        preferred_element_type=jnp.float32,
    )
    y = y + b_ref[...].astype(jnp.float32)       # f32 bias + tanh epilogue
    o_ref[...] = jnp.tanh(y).astype(o_ref.dtype)


def _pick_block_n(h_out, h_in, w_itemsize):
    """Output-feature tile width.

    Prefer exactly two tiles (one per v7x TensorCore) when that width is
    128-aligned, else 512/384/256/128, else a single full-width block for
    tiny/test sizes.  A VMEM guardrail (double-buffered weight tile must stay
    well under v5e's 16 MiB default scoped VMEM) can force a narrower tile.
    """
    candidates = []
    if h_out % 2 == 0 and (h_out // 2) % 128 == 0:
        candidates.append(h_out // 2)            # 2 tiles -> even megacore split
    for c in (512, 384, 256, 128):
        if h_out % c == 0 and c not in candidates:
            candidates.append(c)
    candidates.append(h_out)                     # fallback: single full block

    vmem_budget = 8 * 1024 * 1024                # headroom under 16 MiB (v5e)
    for bn in candidates:
        if 2 * h_in * bn * w_itemsize <= vmem_budget:
            return bn
    return 128 if h_out % 128 == 0 else h_out


def pooler_forward(hidden_states, weight, bias):
    """ViLT Pooler: tanh(hidden_states[:, 0] @ weight.T + bias).

    hidden_states: [B, S, H_in]                     (any float dtype)
    weight:        [H_out, H_in]  nn.Linear layout  (store it in bf16 for speed)
    bias:          [H_out]
    returns:       [B, H_out]  in hidden_states' dtype
    """
    B, S, H_in = hidden_states.shape
    H_out, H_in_w = weight.shape
    assert H_in == H_in_w, "weight in-features must match hidden size"

    # First-token slice in the wrapper: only B*H_in bytes, negligible next to
    # the weight read, and it keeps the kernel's x tile a clean 2-D block.
    x0 = hidden_states[:, 0, :]

    # Pad batch (the sublane / MXU-M dim) to a full sublane multiple so the
    # x / output tiles need no masked loads/stores; crop after the call.
    x_itemsize = jnp.dtype(hidden_states.dtype).itemsize
    sublane = max(8, 32 // x_itemsize)           # 8 (f32), 16 (bf16), 32 (int8)
    Bp = ((B + sublane - 1) // sublane) * sublane
    if Bp != B:
        x0 = jnp.pad(x0, ((0, Bp - B), (0, 0)))

    bias2d = bias.reshape(1, H_out)

    w_itemsize = jnp.dtype(weight.dtype).itemsize
    b_itemsize = jnp.dtype(bias.dtype).itemsize
    block_n = _pick_block_n(H_out, H_in, w_itemsize)
    grid = (pl.cdiv(H_out, block_n),)

    cost = pl.CostEstimate(
        flops=2 * Bp * H_in * H_out,
        transcendentals=Bp * H_out,
        bytes_accessed=(H_out * H_in * w_itemsize        # weight (dominant)
                        + Bp * H_in * x_itemsize         # x
                        + Bp * H_out * x_itemsize        # output
                        + H_out * b_itemsize),           # bias
    )

    out = pl.pallas_call(
        _pooler_kernel,
        out_shape=jax.ShapeDtypeStruct((Bp, H_out), hidden_states.dtype),
        grid_spec=pl.GridSpec(
            grid=grid,
            in_specs=[
                # First-token activations: same full block for every tile.
                pl.BlockSpec((Bp, H_in), lambda j: (0, 0)),
                # Weight ROW tile in the original [out, in] layout
                # (no host-side transpose; double-buffered across the grid).
                pl.BlockSpec((block_n, H_in), lambda j: (j, 0)),
                # Bias tile rides with the weight tile.
                pl.BlockSpec((1, block_n), lambda j: (0, j)),
            ],
            out_specs=pl.BlockSpec((Bp, block_n), lambda j: (0, j)),
        ),
        compiler_params=pltpu.CompilerParams(
            # Output-column tiles are independent -> megacore sharding on v7x.
            dimension_semantics=("parallel",),
        ),
        cost_estimate=cost,
    )(x0, weight, bias2d)

    return out[:B] if Bp != B else out


if __name__ == "__main__":
    key = jax.random.PRNGKey(0)
    k_x, k_w, k_b = jax.random.split(key, 3)

    B, S, H = 2, 8, 32  # batch, seq, hidden (small test shapes)

    hidden_states = jax.random.normal(k_x, (B, S, H), dtype=jnp.float32)
    # nn.Linear parameter layout ([out, in], [out]).  Stored in bf16 so the
    # dominant weight DMA is half-width; the kernel accumulates in f32.
    weight = (jax.random.normal(k_w, (H, H), dtype=jnp.float32) * 0.02).astype(jnp.bfloat16)
    bias = (jax.random.normal(k_b, (H,), dtype=jnp.float32) * 0.02).astype(jnp.bfloat16)

    out = jax.jit(pooler_forward)(hidden_states, weight, bias)
    jax.block_until_ready(out)

    # Reference check in plain JAX (matches PyTorch semantics; uses the same
    # bf16-stored parameter values, so only accumulation order/precision differ).
    ref = jnp.tanh(
        hidden_states[:, 0, :] @ weight.astype(jnp.float32).T
        + bias.astype(jnp.float32)
    )
    assert out.shape == (B, H)
    assert jnp.allclose(out, ref, atol=5e-3, rtol=5e-3), float(jnp.max(jnp.abs(out - ref)))

    print("KERNEL_OK")
</pallas_src>

<mosaic_0001>
module attributes {stable_mosaic.version = 11 : i64} {
  func.func @_pooler_kernel(%arg0: i32, %arg1: memref<8x32xf32, #tpu.memory_space<vmem>>, %arg2: memref<32x32xbf16, #tpu.memory_space<vmem>>, %arg3: memref<1x32xbf16, #tpu.memory_space<vmem>>, %arg4: memref<8x32xf32, #tpu.memory_space<vmem>>) attributes {dimension_semantics = [#tpu.dimension_semantics<parallel>], iteration_bounds = array<i64: 1>, scalar_prefetch = 0 : i64, scratch_operands = 0 : i64, tpu.core_type = #tpu.core_type<tc>, window_params = [{pipeline_mode = #tpu.pipeline_mode<synchronous>, transform_indices = @transform_0, window_bounds = array<i64: 8, 32>}, {transform_indices = @transform_1, window_bounds = array<i64: 32, 32>}, {transform_indices = @transform_2, window_bounds = array<i64: 1, 32>}, {transform_indices = @transform_3, window_bounds = array<i64: 8, 32>}]} {
    %c0 = arith.constant 0 : index
    %c0_0 = arith.constant 0 : index
    %0 = vector.load %arg1[%c0, %c0_0] : memref<8x32xf32, #tpu.memory_space<vmem>>, vector<8x32xf32>
    %c0_1 = arith.constant 0 : index
    %c0_2 = arith.constant 0 : index
    %1 = vector.load %arg2[%c0_1, %c0_2] : memref<32x32xbf16, #tpu.memory_space<vmem>>, vector<32x32xbf16>
    %2 = arith.truncf %0 : vector<8x32xf32> to vector<8x32xbf16>
    %cst = arith.constant dense<0.000000e+00> : vector<8x32xf32>
    %3 = tpu.matmul %2, %1, %cst {dimension_numbers = #tpu.dot_dimension_numbers<[1], [1], [0], [0], [0, 0, 1, 0], [], []>} : vector<8x32xbf16>, vector<32x32xbf16>, vector<8x32xf32> -> vector<8x32xf32>
    %c0_3 = arith.constant 0 : index
    %c0_4 = arith.constant 0 : index
    %4 = vector.load %arg3[%c0_3, %c0_4] : memref<1x32xbf16, #tpu.memory_space<vmem>>, vector<1x32xbf16>
    %5 = arith.extf %4 : vector<1x32xbf16> to vector<1x32xf32>
    %6 = vector.broadcast %5 : vector<1x32xf32> to vector<8x32xf32>
    %7 = arith.addf %3, %6 : vector<8x32xf32>
    %8 = math.tanh %7 : vector<8x32xf32>
    %c0_5 = arith.constant 0 : index
    %c0_6 = arith.constant 0 : index
    %9 = vector.load %arg4[%c0_5, %c0_6] : memref<8x32xf32, #tpu.memory_space<vmem>>, vector<8x32xf32>
    tpu.vector_store %arg4[%c0_5, %c0_6], %8 {strides = array<i32>} : memref<8x32xf32, #tpu.memory_space<vmem>>, vector<8x32xf32>,
    return
  }
  func.func @transform_0(%arg0: i32) -> (i32, i32) {
    %c0_i32 = arith.constant 0 : i32
    %c0_i32_0 = arith.constant 0 : i32
    %c0_i32_1 = arith.constant 0 : i32
    return %c0_i32, %c0_i32_0 : i32, i32
  }
  func.func @transform_1(%arg0: i32) -> (i32, i32) {
    %c0_i32 = arith.constant 0 : i32
    %c0_i32_0 = arith.constant 0 : i32
    return %arg0, %c0_i32 : i32, i32
  }
  func.func @transform_2(%arg0: i32) -> (i32, i32) {
    %c0_i32 = arith.constant 0 : i32
    %c0_i32_0 = arith.constant 0 : i32
    return %c0_i32, %arg0 : i32, i32
  }
  func.func @transform_3(%arg0: i32) -> (i32, i32) {
    %c0_i32 = arith.constant 0 : i32
    %c0_i32_0 = arith.constant 0 : i32
    return %c0_i32, %arg0 : i32, i32
  }
}

</mosaic_0001>

<llo_original>
// kernel: pooler_forward.1
$region0: #{pooler_forward.1}
  #allocation0 [shape = 'u32[]', space=smem, size = 0x4, offset = 0x4, fixed_abs, tag = 'smem constant byte address 0x4 - core index']
  #allocation1 [shape = 'u32[144,128]{1,0:T(1,128)}', space=vmem, size = 0x12000, scoped, tag = 'internal scratch']
  %s0 = inlined_call_operand.vmem [shape: f32[8,32], index: 0, kind: input, shape index: {}]
  %s1 = inlined_call_operand.vmem [shape: bf16[32,32], index: 1, kind: input, shape index: {}]
  %s2 = inlined_call_operand.vmem [shape: bf16[1,32], index: 2, kind: input, shape index: {}]
  %s3 = inlined_call_operand.vmem [shape: f32[8,32], index: 3, kind: output, shape index: {}]
  %s4 = sld [smem:[#allocation0]]
  $region22: #{pooler_forward.1} parent=0
    _
  %s6 = ssub.s32 1, %s4
  %s7 = scalar_select 0, %s6, %s4
  // Predicated region
  $region2: #{pooler_forward.1} parent=0 // pred_check
    _
  $region3: #{pooler_forward.1} parent=0 // pred_check_branch
    %9 = sbr.rel (0) target = $region5
  $region4: #{pooler_forward.1} parent=0 // pred_region
    _
  $region5: #{pooler_forward.1} parent=0 // pred_fallthru
    _
  // Predicated region
  $region6: #{pooler_forward.1} parent=0 // pred_check
    _
  $region7: #{pooler_forward.1} parent=0 // pred_check_branch
    %11 = sbr.rel (0) target = $region9
  $region8: #{pooler_forward.1} parent=0 // pred_region
    _
  $region9: #{pooler_forward.1} parent=0 // pred_fallthru
    _
  // Predicated region
  $region10: #{pooler_forward.1} parent=0 // pred_check
    _
  $region11: #{pooler_forward.1} parent=0 // pred_check_branch
    %13 = sbr.rel (0) target = $region13
  $region12: #{pooler_forward.1} parent=0 // pred_region
    _
  $region13: #{pooler_forward.1} parent=0 // pred_fallthru
    _
  %v15 = vld [vmem:[%s0] sm:$0xff]
  %v16 = vld [vmem:[%s1] sm:$0xf]
  %v17 = vld [vmem:[%s1 + $0x4] sm:$0xf]
  %v18 = vld [vmem:[%s1 + $0x8] sm:$0xf]
  %v19 = vld [vmem:[%s1 + $0xc] sm:$0xf]
  %v20 = vpack.c.bf16 %v15, %v15
  %v21 = vld [vmem:[%s2] sm:$0x1]
  %v22 = vunpack.c.l.bf16 %v21
  %v23 = vlaneseq
  %v24 = vshrl.u32 %v23, 7
  %v25 = vsub.s32 0, %v24
  %v26 = vrot.slane %v22, %v25
  %v31 = vunpack.c.l.b16 %v16
  %v32 = vunpack.c.l.b16 %v17
  %v33 = vunpack.c.l.b16 %v18
  %v34 = vunpack.c.l.b16 %v19
  %v35 = vpack.c.b16 %v32, %v31
  %v36 = vpack.c.b16 %v34, %v33
  %vm37 = vcmask 261120
  %v39 = vsel %vm37, %v20, 0
  %v42 = vsel %vm37, %v35, 0
  %v45 = vsel %vm37, %v36, 0
  %47 = vmatprep.subr.bf16.mxu0 0
  %48 = vmatpush1.bf16.xpose.msra.mxu0 %v42
  %49 = vmatprep.subr.bf16.mxu0 0
  %50 = vmatpush1.bf16.xpose.msra.mxu0 %v45
  %51 = vmatprep.subr.bf16.mxu0 0
  %52 = vmatpush1.bf16.xpose.msra.mxu0 0
  %53 = vmatprep.subr.bf16.mxu0 0
  %54 = vmatpush1.bf16.xpose.msra.mxu0 0
  %55 = vmatprep.subr.bf16.mxu0 0
  %56 = vmatpush1.bf16.xpose.msra.mxu0 0
  %57 = vmatprep.subr.bf16.mxu0 0
  %58 = vmatpush1.bf16.xpose.msra.mxu0 0
  %59 = vmatprep.subr.bf16.mxu0 0
  %60 = vmatpush1.bf16.xpose.msra.mxu0 0
  %61 = vmatprep.subr.bf16.mxu0 0
  %62 = vmatpush1.bf16.xpose.msra.mxu0 0
  %63 = vmatprep.subr.bf16.mxu0 0
  %64 = vmatpush1.bf16.xpose.msra.mxu0 0
  %65 = vmatprep.subr.bf16.mxu0 0
  %66 = vmatpush1.bf16.xpose.msra.mxu0 0
  %67 = vmatprep.subr.bf16.mxu0 0
  %68 = vmatpush1.bf16.xpose.msra.mxu0 0
  %69 = vmatprep.subr.bf16.mxu0 0
  %70 = vmatpush1.bf16.xpose.msra.mxu0 0
  %71 = vmatprep.subr.bf16.mxu0 0
  %72 = vmatpush1.bf16.xpose.msra.mxu0 0
  %73 = vmatprep.subr.bf16.mxu0 0
  %74 = vmatpush1.bf16.xpose.msra.mxu0 0
  %75 = vmatprep.subr.bf16.mxu0 0
  %76 = vmatpush1.bf16.xpose.msra.mxu0 0
  %77 = vmatprep.subr.bf16.mxu0 0
  %78 = vmatpush1.bf16.xpose.msra.mxu0 0
  %79 = vmatprep.mubr.bf16.mxu0 0
  %80 = vmatmul.mubr.bf16.gmra.mrb[0].mxu0 %v39
  %v81 = vpop.f32.mrb[0].mxu0
  %v82 = vadd.f32 %v26, %v81
  %v83 = vpop.f32.mrb[0].mxu0
  %v84 = vpop.f32.mrb[0].mxu0
  %v85 = vpop.f32.mrb[0].mxu0
  %86 = vdwg.mxu0
  %v87 = vtanh.pop %v82
  %88 = vst.msk [vmem:[%s3] sm:$0xff] %vm37, %v87
  // Predicated region
  $region14: #{pooler_forward.1} parent=0 // pred_check
    _
  $region15: #{pooler_forward.1} parent=0 // pred_check_branch
    %90 = sbr.rel (0) target = $region17
  $region16: #{pooler_forward.1} parent=0 // pred_region
    _
  $region17: #{pooler_forward.1} parent=0 // pred_fallthru
    _
  // Predicated region
  $region18: #{pooler_forward.1} parent=0 // pred_check
    _
  $region19: #{pooler_forward.1} parent=0 // pred_check_branch
    %92 = sbr.rel (0) target = $region21
  $region20: #{pooler_forward.1} parent=0 // pred_region
    _
  $region21: #{pooler_forward.1} parent=0 // pred_fallthru
    _

</llo_original>
